<compile_context>
chip_gen: v6e
topology: v6e:2x2x1
jax: 0.10.0
libtpu: 0.0.40
codegen_flags: <defaults>
</compile_context>

<pallas_src>
import math
import jax
import jax.numpy as jnp
from jax.experimental import pallas as pl
from jax.experimental.pallas import tpu as pltpu


def _round_up(a, b):
    return ((a + b - 1) // b) * b


# ----------------------------------------------------------------------------
# Kernels
# ----------------------------------------------------------------------------
def _noisy_linear_kernel_single_k(x_ref, mu_w_ref, sigma_w_ref, f_out_ref,
                                  f_in_ref, mu_b_ref, sigma_b_ref, eps_b_ref,
                                  o_ref):
    # Effective weight tile, noise rebuilt on-chip from its factors (VPU):
    #   w_eff = mu_w + sigma_w * (f_out ⊗ f_in)
    eps_tile = f_out_ref[...] * f_in_ref[...]              # (tn,1)*(1,tk)->(tn,tk)
    w_eff = mu_w_ref[...] + sigma_w_ref[...] * eps_tile    # (tn, tk)

    # MXU: contract x (tm,tk) with w_eff (tn,tk) on K (== x @ w_eff.T).
    acc = jax.lax.dot_general(
        x_ref[...], w_eff,
        dimension_numbers=(((1,), (1,)), ((), ())),
        preferred_element_type=jnp.float32)

    b_eff = mu_b_ref[...] + sigma_b_ref[...] * eps_b_ref[...]   # (1, tn)
    o_ref[...] = (acc + b_eff).astype(o_ref.dtype)


def _noisy_linear_kernel_multi_k(x_ref, mu_w_ref, sigma_w_ref, f_out_ref,
                                 f_in_ref, mu_b_ref, sigma_b_ref, eps_b_ref,
                                 o_ref, acc_ref):
    k = pl.program_id(2)

    @pl.when(k == 0)
    def _():
        acc_ref[...] = jnp.zeros_like(acc_ref)

    eps_tile = f_out_ref[...] * f_in_ref[...]               # (tn, tk)
    w_eff = mu_w_ref[...] + sigma_w_ref[...] * eps_tile     # (tn, tk)

    acc_ref[...] += jax.lax.dot_general(
        x_ref[...], w_eff,
        dimension_numbers=(((1,), (1,)), ((), ())),
        preferred_element_type=jnp.float32)

    @pl.when(k == pl.num_programs(2) - 1)
    def _():
        b_eff = mu_b_ref[...] + sigma_b_ref[...] * eps_b_ref[...]   # (1, tn)
        o_ref[...] = (acc_ref[...] + b_eff).astype(o_ref.dtype)


# ----------------------------------------------------------------------------
# Wrapper
# ----------------------------------------------------------------------------
def noisy_linear(x, mu_w, sigma_w, f_out, f_in, mu_b, sigma_b, eps_b,
                 *, tm=128, tn=256, tk=512):
    """NoisyLinear forward.

    x:               [..., in_dim]        float32
    mu_w, sigma_w:   [out_dim, in_dim]    float32 (torch.nn.Linear layout)
    f_out, f_in:     [out_dim], [in_dim]  factorized-noise vectors
                                          (eps_w = outer(f_out, f_in))
    mu_b, sigma_b, eps_b: [out_dim]
    returns          [..., out_dim]
    """
    lead_shape = x.shape[:-1]
    in_dim = x.shape[-1]
    out_dim = mu_w.shape[0]
    x2 = x.reshape(-1, in_dim)
    batch = x2.shape[0]

    # Clamp tiles to the (padded) problem size; keep lane/sublane alignment.
    tm = min(tm, _round_up(batch, 8))
    tn = min(tn, _round_up(out_dim, 128))
    tk = min(tk, _round_up(in_dim, 128))

    M = _round_up(batch, tm)
    N = _round_up(out_dim, tn)
    K = _round_up(in_dim, tk)

    # Lane-dense, tile-aligned padding (wrapper-side layout plumbing; zero
    # padding does not change the matmul; padded outputs are sliced off).
    x_p = jnp.pad(x2, ((0, M - batch), (0, K - in_dim)))
    mu_w_p = jnp.pad(mu_w, ((0, N - out_dim), (0, K - in_dim)))
    sigma_w_p = jnp.pad(sigma_w, ((0, N - out_dim), (0, K - in_dim)))
    f_out_p = jnp.pad(f_out, (0, N - out_dim)).reshape(N, 1)
    f_in_p = jnp.pad(f_in, (0, K - in_dim)).reshape(1, K)
    mu_b_p = jnp.pad(mu_b, (0, N - out_dim)).reshape(1, N)
    sigma_b_p = jnp.pad(sigma_b, (0, N - out_dim)).reshape(1, N)
    eps_b_p = jnp.pad(eps_b, (0, N - out_dim)).reshape(1, N)

    gm, gn, gk = M // tm, N // tn, K // tk

    if gk == 1:
        # Typical DQN layer: whole K fits in one tile -> no accumulator scratch,
        # no init/epilogue branching, bias fused into the single pass.
        grid_spec = pltpu.PrefetchScalarGridSpec(
            num_scalar_prefetch=0,
            grid=(gm, gn),
            in_specs=[
                pl.BlockSpec((tm, tk), lambda i, j: (i, 0)),   # x
                pl.BlockSpec((tn, tk), lambda i, j: (j, 0)),   # mu_w
                pl.BlockSpec((tn, tk), lambda i, j: (j, 0)),   # sigma_w
                pl.BlockSpec((tn, 1), lambda i, j: (j, 0)),    # f_out (column)
                pl.BlockSpec((1, tk), lambda i, j: (0, 0)),    # f_in  (row)
                pl.BlockSpec((1, tn), lambda i, j: (0, j)),    # mu_b
                pl.BlockSpec((1, tn), lambda i, j: (0, j)),    # sigma_b
                pl.BlockSpec((1, tn), lambda i, j: (0, j)),    # eps_b
            ],
            out_specs=pl.BlockSpec((tm, tn), lambda i, j: (i, j)),
        )
        kernel = _noisy_linear_kernel_single_k
        dim_sem = ("parallel", "parallel")
    else:
        grid_spec = pltpu.PrefetchScalarGridSpec(
            num_scalar_prefetch=0,
            grid=(gm, gn, gk),
            in_specs=[
                pl.BlockSpec((tm, tk), lambda i, j, k: (i, k)),   # x
                pl.BlockSpec((tn, tk), lambda i, j, k: (j, k)),   # mu_w
                pl.BlockSpec((tn, tk), lambda i, j, k: (j, k)),   # sigma_w
                pl.BlockSpec((tn, 1), lambda i, j, k: (j, 0)),    # f_out
                pl.BlockSpec((1, tk), lambda i, j, k: (0, k)),    # f_in
                pl.BlockSpec((1, tn), lambda i, j, k: (0, j)),    # mu_b
                pl.BlockSpec((1, tn), lambda i, j, k: (0, j)),    # sigma_b
                pl.BlockSpec((1, tn), lambda i, j, k: (0, j)),    # eps_b
            ],
            out_specs=pl.BlockSpec((tm, tn), lambda i, j, k: (i, j)),
            scratch_shapes=[pltpu.VMEM((tm, tn), jnp.float32)],
        )
        kernel = _noisy_linear_kernel_multi_k
        dim_sem = ("parallel", "parallel", "arbitrary")

    out = pl.pallas_call(
        kernel,
        out_shape=jax.ShapeDtypeStruct((M, N), x.dtype),
        grid_spec=grid_spec,
        compiler_params=pltpu.CompilerParams(
            dimension_semantics=dim_sem,
            vmem_limit_bytes=32 * 1024 * 1024,
        ),
    )(x_p, mu_w_p, sigma_w_p, f_out_p, f_in_p, mu_b_p, sigma_b_p, eps_b_p)

    return out[:batch, :out_dim].reshape(*lead_shape, out_dim)


# ----------------------------------------------------------------------------
# Parameter / noise init mirroring the PyTorch module (host-side, not a kernel)
# ----------------------------------------------------------------------------
def factorize_noise(key, size):
    # torch: x ~ Normal(0, 0.001); return sign(x) * sqrt(|x|)
    x = 0.001 * jax.random.normal(key, (size,), dtype=jnp.float32)
    return jnp.sign(x) * jnp.sqrt(jnp.abs(x))


def init_noisy_linear_params(key, in_dim, out_dim):
    sigma_init = 0.4
    bound = math.sqrt(1.0 / in_dim)
    k_mu_w, k_mu_b, k_eps_out, k_eps_in, k_eps_b = jax.random.split(key, 5)

    mu_w = jax.random.uniform(k_mu_w, (out_dim, in_dim), jnp.float32, -bound, bound)
    mu_b = jax.random.uniform(k_mu_b, (out_dim,), jnp.float32, -bound, bound)
    sigma_w = jnp.full((out_dim, in_dim), sigma_init / math.sqrt(out_dim), jnp.float32)
    sigma_b = jnp.full((out_dim,), sigma_init / math.sqrt(out_dim), jnp.float32)

    # reset_noise(): eps_w = f(out) ⊗ f(in) (kept factorized), eps_b = f(out)
    f_out = factorize_noise(k_eps_out, out_dim)
    f_in = factorize_noise(k_eps_in, in_dim)
    eps_b = factorize_noise(k_eps_b, out_dim)

    return mu_w, mu_b, sigma_w, sigma_b, f_out, f_in, eps_b


def _reference(x, mu_w, sigma_w, f_out, f_in, mu_b, sigma_b, eps_b):
    # Pure-JAX reference (F.linear semantics with eps_w = outer(f_out, f_in)).
    eps_w = jnp.outer(f_out, f_in)
    w_eff = mu_w + sigma_w * eps_w
    b_eff = mu_b + sigma_b * eps_b
    return x @ w_eff.T + b_eff


if __name__ == "__main__":
    key = jax.random.PRNGKey(0)
    k_x, k_params, k_x2, k_params2 = jax.random.split(key, 4)

    # --- Case 1: typical small DQN layer (single-K-pass kernel path) ---------
    batch, in_dim, out_dim = 8, 32, 32
    x = jax.random.normal(k_x, (batch, in_dim), dtype=jnp.float32)
    mu_w, mu_b, sigma_w, sigma_b, f_out, f_in, eps_b = init_noisy_linear_params(
        k_params, in_dim, out_dim)

    y = noisy_linear(x, mu_w, sigma_w, f_out, f_in, mu_b, sigma_b, eps_b)
    y = jax.block_until_ready(y)
    y_ref = _reference(x, mu_w, sigma_w, f_out, f_in, mu_b, sigma_b, eps_b)
    assert y.shape == (batch, out_dim)
    assert jnp.allclose(y, y_ref, atol=1e-5, rtol=1e-5), "mismatch (single-K path)"

    # --- Case 2: larger in_dim with small tk to exercise the K-tiled kernel --
    batch2, in_dim2, out_dim2 = 8, 256, 32
    x2 = jax.random.normal(k_x2, (batch2, in_dim2), dtype=jnp.float32)
    mu_w2, mu_b2, sigma_w2, sigma_b2, f_out2, f_in2, eps_b2 = init_noisy_linear_params(
        k_params2, in_dim2, out_dim2)

    y2 = noisy_linear(x2, mu_w2, sigma_w2, f_out2, f_in2, mu_b2, sigma_b2, eps_b2,
                      tk=128)
    y2 = jax.block_until_ready(y2)
    y2_ref = _reference(x2, mu_w2, sigma_w2, f_out2, f_in2, mu_b2, sigma_b2, eps_b2)
    assert y2.shape == (batch2, out_dim2)
    assert jnp.allclose(y2, y2_ref, atol=1e-5, rtol=1e-5), "mismatch (multi-K path)"

    print("KERNEL_OK")
</pallas_src>

<mosaic_0001>
module attributes {stable_mosaic.version = 11 : i64} {
  func.func @_noisy_linear_kernel_single_k(%arg0: i32, %arg1: i32, %arg2: memref<8x128xf32, #tpu.memory_space<vmem>>, %arg3: memref<128x128xf32, #tpu.memory_space<vmem>>, %arg4: memref<128x128xf32, #tpu.memory_space<vmem>>, %arg5: memref<128x1xf32, #tpu.memory_space<vmem>>, %arg6: memref<1x128xf32, #tpu.memory_space<vmem>>, %arg7: memref<1x128xf32, #tpu.memory_space<vmem>>, %arg8: memref<1x128xf32, #tpu.memory_space<vmem>>, %arg9: memref<1x128xf32, #tpu.memory_space<vmem>>, %arg10: memref<8x128xf32, #tpu.memory_space<vmem>>) attributes {dimension_semantics = [#tpu.dimension_semantics<parallel>, #tpu.dimension_semantics<parallel>], iteration_bounds = array<i64: 1, 1>, scalar_prefetch = 0 : i64, scratch_operands = 0 : i64, tpu.core_type = #tpu.core_type<tc>, window_params = [{transform_indices = @transform_0, window_bounds = array<i64: 8, 128>}, {transform_indices = @transform_1, window_bounds = array<i64: 128, 128>}, {transform_indices = @transform_2, window_bounds = array<i64: 128, 128>}, {transform_indices = @transform_3, window_bounds = array<i64: 128, 1>}, {pipeline_mode = #tpu.pipeline_mode<synchronous>, transform_indices = @transform_4, window_bounds = array<i64: 1, 128>}, {transform_indices = @transform_5, window_bounds = array<i64: 1, 128>}, {transform_indices = @transform_6, window_bounds = array<i64: 1, 128>}, {transform_indices = @transform_7, window_bounds = array<i64: 1, 128>}, {transform_indices = @transform_8, window_bounds = array<i64: 8, 128>}]} {
    %c0 = arith.constant 0 : index
    %c0_0 = arith.constant 0 : index
    %0 = vector.load %arg5[%c0, %c0_0] : memref<128x1xf32, #tpu.memory_space<vmem>>, vector<128x1xf32>
    %c0_1 = arith.constant 0 : index
    %c0_2 = arith.constant 0 : index
    %1 = vector.load %arg6[%c0_1, %c0_2] : memref<1x128xf32, #tpu.memory_space<vmem>>, vector<1x128xf32>
    %2 = vector.broadcast %0 : vector<128x1xf32> to vector<128x128xf32>
    %3 = vector.broadcast %1 : vector<1x128xf32> to vector<128x128xf32>
    %4 = arith.mulf %2, %3 : vector<128x128xf32>
    %c0_3 = arith.constant 0 : index
    %c0_4 = arith.constant 0 : index
    %5 = vector.load %arg3[%c0_3, %c0_4] : memref<128x128xf32, #tpu.memory_space<vmem>>, vector<128x128xf32>
    %c0_5 = arith.constant 0 : index
    %c0_6 = arith.constant 0 : index
    %6 = vector.load %arg4[%c0_5, %c0_6] : memref<128x128xf32, #tpu.memory_space<vmem>>, vector<128x128xf32>
    %7 = arith.mulf %6, %4 : vector<128x128xf32>
    %8 = arith.addf %5, %7 : vector<128x128xf32>
    %c0_7 = arith.constant 0 : index
    %c0_8 = arith.constant 0 : index
    %9 = vector.load %arg2[%c0_7, %c0_8] : memref<8x128xf32, #tpu.memory_space<vmem>>, vector<8x128xf32>
    %cst = arith.constant dense<0.000000e+00> : vector<8x128xf32>
    %10 = tpu.matmul %9, %8, %cst {dimension_numbers = #tpu.dot_dimension_numbers<[1], [1], [0], [0], [0, 0, 1, 0], [], []>} : vector<8x128xf32>, vector<128x128xf32>, vector<8x128xf32> -> vector<8x128xf32>
    %c0_9 = arith.constant 0 : index
    %c0_10 = arith.constant 0 : index
    %11 = vector.load %arg7[%c0_9, %c0_10] : memref<1x128xf32, #tpu.memory_space<vmem>>, vector<1x128xf32>
    %c0_11 = arith.constant 0 : index
    %c0_12 = arith.constant 0 : index
    %12 = vector.load %arg8[%c0_11, %c0_12] : memref<1x128xf32, #tpu.memory_space<vmem>>, vector<1x128xf32>
    %c0_13 = arith.constant 0 : index
    %c0_14 = arith.constant 0 : index
    %13 = vector.load %arg9[%c0_13, %c0_14] : memref<1x128xf32, #tpu.memory_space<vmem>>, vector<1x128xf32>
    %14 = arith.mulf %12, %13 : vector<1x128xf32>
    %15 = arith.addf %11, %14 : vector<1x128xf32>
    %16 = vector.broadcast %15 : vector<1x128xf32> to vector<8x128xf32>
    %17 = arith.addf %10, %16 : vector<8x128xf32>
    %c0_15 = arith.constant 0 : index
    %c0_16 = arith.constant 0 : index
    %18 = vector.load %arg10[%c0_15, %c0_16] : memref<8x128xf32, #tpu.memory_space<vmem>>, vector<8x128xf32>
    tpu.vector_store %arg10[%c0_15, %c0_16], %17 {strides = array<i32>} : memref<8x128xf32, #tpu.memory_space<vmem>>, vector<8x128xf32>,
    return
  }
  func.func @transform_0(%arg0: i32, %arg1: i32) -> (i32, i32) {
    %c0_i32 = arith.constant 0 : i32
    %c0_i32_0 = arith.constant 0 : i32
    return %arg0, %c0_i32 : i32, i32
  }
  func.func @transform_1(%arg0: i32, %arg1: i32) -> (i32, i32) {
    %c0_i32 = arith.constant 0 : i32
    %c0_i32_0 = arith.constant 0 : i32
    return %arg1, %c0_i32 : i32, i32
  }
  func.func @transform_2(%arg0: i32, %arg1: i32) -> (i32, i32) {
    %c0_i32 = arith.constant 0 : i32
    %c0_i32_0 = arith.constant 0 : i32
    return %arg1, %c0_i32 : i32, i32
  }
  func.func @transform_3(%arg0: i32, %arg1: i32) -> (i32, i32) {
    %c0_i32 = arith.constant 0 : i32
    %c0_i32_0 = arith.constant 0 : i32
    return %arg1, %c0_i32 : i32, i32
  }
  func.func @transform_4(%arg0: i32, %arg1: i32) -> (i32, i32) {
    %c0_i32 = arith.constant 0 : i32
    %c0_i32_0 = arith.constant 0 : i32
    %c0_i32_1 = arith.constant 0 : i32
    return %c0_i32, %c0_i32_0 : i32, i32
  }
  func.func @transform_5(%arg0: i32, %arg1: i32) -> (i32, i32) {
    %c0_i32 = arith.constant 0 : i32
    %c0_i32_0 = arith.constant 0 : i32
    return %c0_i32, %arg1 : i32, i32
  }
  func.func @transform_6(%arg0: i32, %arg1: i32) -> (i32, i32) {
    %c0_i32 = arith.constant 0 : i32
    %c0_i32_0 = arith.constant 0 : i32
    return %c0_i32, %arg1 : i32, i32
  }
  func.func @transform_7(%arg0: i32, %arg1: i32) -> (i32, i32) {
    %c0_i32 = arith.constant 0 : i32
    %c0_i32_0 = arith.constant 0 : i32
    return %c0_i32, %arg1 : i32, i32
  }
  func.func @transform_8(%arg0: i32, %arg1: i32) -> (i32, i32) {
    %c0_i32 = arith.constant 0 : i32
    return %arg0, %arg1 : i32, i32
  }
}

</mosaic_0001>

<llo_original>
// kernel: tpu_custom_call.1
$region0: #{tpu_custom_call.1}
  #allocation0 [shape = 'u32[]', space=smem, size = 0x4, offset = 0x4, fixed_abs, tag = 'smem constant byte address 0x4 - core index']
  #allocation1 [shape = 'u32[144,128]{1,0:T(1,128)}', space=vmem, size = 0x12000, scoped, tag = 'internal scratch']
  %s0 = inlined_call_operand.hbm [shape: f32[8,128], index: 0, kind: input, shape index: {}]
  %s1 = inlined_call_operand.vmem [shape: f32[128,128], index: 1, kind: input, shape index: {}]
  %s2 = inlined_call_operand.hbm [shape: f32[128,128], index: 2, kind: input, shape index: {}]
  %s3 = inlined_call_operand.vmem [shape: f32[128,1], index: 3, kind: input, shape index: {}]
  %s4 = inlined_call_operand.vmem [shape: f32[1,128], index: 4, kind: input, shape index: {}]
  %s5 = inlined_call_operand.vmem [shape: f32[1,128], index: 5, kind: input, shape index: {}]
  %s6 = inlined_call_operand.vmem [shape: f32[1,128], index: 6, kind: input, shape index: {}]
  %s7 = inlined_call_operand.vmem [shape: f32[1,128], index: 7, kind: input, shape index: {}]
  %s8 = inlined_call_operand.hbm [shape: f32[8,128], index: 8, kind: output, shape index: {}]
  %s9 = sld [smem:[#allocation0]]
  $region50: #{tpu_custom_call.1} parent=0
    _
  %s11 = ssub.s32 1, %s9
  %s12 = scalar_select 0, %s11, %s9
  $region1: #{tpu_custom_call.1} parent=0
    #allocation2 [shape = 'u8[4096]{0}', space=vmem, size = 0x1000, scoped, tag = 'input window, operand 0, single buffered']
    #allocation3 [shape = 's32[1]{0}', space=sflag, size = 0x4, scoped, tag = 'scoped memory for tpu_custom_call.1']
    #allocation4 [shape = 's32[1]{0}', space=sflag, size = 0x4, scoped, tag = 'scoped memory for tpu_custom_call.1']
    #allocation5 [shape = 'u8[65536]{0}', space=vmem, size = 0x10000, scoped, tag = 'input window, operand 2, single buffered']
    #allocation6 [shape = 's32[1]{0}', space=sflag, size = 0x4, scoped, tag = 'scoped memory for tpu_custom_call.1']
    #allocation7 [shape = 'u8[4096]{0}', space=vmem, size = 0x1000, scoped, tag = 'output window, operand 0, single buffered']
    %13 = vsyncpa [#allocation3], 0
    %14 = vsyncpa [#allocation6], 0
    %15 = vsyncpa [#allocation4], 0
    // Predicated region
    $region2: #{tpu_custom_call.1} parent=1 // pred_check
      _
    $region3: #{tpu_custom_call.1} parent=1 // pred_check_branch
      %17 = sbr.rel (0) target = $region5
    $region4: #{tpu_custom_call.1} parent=1 // pred_region
      %s19 = ssub.s32 128, 128
      %20 = vsyncadd [#allocation3], %s19
      %s22 = sshll.u32 [#allocation2], 4
      %s23 = int_to_ptr.vmem [resolvable:$true] %s22
      %25 = dma.hbm_to_vmem [thread:$0]  %s0, 128, %s23, [#allocation3]
    $region5: #{tpu_custom_call.1} parent=1 // pred_fallthru
      _
    // Predicated region
    $region6: #{tpu_custom_call.1} parent=1 // pred_check
      _
    $region7: #{tpu_custom_call.1} parent=1 // pred_check_branch
      %27 = sbr.rel (0) target = $region9
    $region8: #{tpu_custom_call.1} parent=1 // pred_region
      _
    $region9: #{tpu_custom_call.1} parent=1 // pred_fallthru
      _
    // Predicated region
    $region10: #{tpu_custom_call.1} parent=1 // pred_check
      _
    $region11: #{tpu_custom_call.1} parent=1 // pred_check_branch
      %29 = sbr.rel (0) target = $region13
    $region12: #{tpu_custom_call.1} parent=1 // pred_region
      %s31 = ssub.s32 2048, 2048
      %32 = vsyncadd [#allocation6], %s31
      %s33 = sshll.u32 [#allocation5], 4
      %s34 = int_to_ptr.vmem [resolvable:$true] %s33
      %39 = dma.hbm_to_vmem [thread:$0]  %s2, 2048, %s34, [#allocation6], 128, 128, 8
    $region13: #{tpu_custom_call.1} parent=1 // pred_fallthru
      _
    // Predicated region
    $region14: #{tpu_custom_call.1} parent=1 // pred_check
      _
    $region15: #{tpu_custom_call.1} parent=1 // pred_check_branch
      %41 = sbr.rel (0) target = $region17
    $region16: #{tpu_custom_call.1} parent=1 // pred_region
      _
    $region17: #{tpu_custom_call.1} parent=1 // pred_fallthru
      _
    // Predicated region
    $region18: #{tpu_custom_call.1} parent=1 // pred_check
      _
    $region19: #{tpu_custom_call.1} parent=1 // pred_check_branch
      %43 = sbr.rel (0) target = $region21
    $region20: #{tpu_custom_call.1} parent=1 // pred_region
      _
    $region21: #{tpu_custom_call.1} parent=1 // pred_fallthru
      _
    // Predicated region
    $region22: #{tpu_custom_call.1} parent=1 // pred_check
      _
    $region23: #{tpu_custom_call.1} parent=1 // pred_check_branch
      %45 = sbr.rel (0) target = $region25
    $region24: #{tpu_custom_call.1} parent=1 // pred_region
      _
    $region25: #{tpu_custom_call.1} parent=1 // pred_fallthru
      _
    // Predicated region
    $region26: #{tpu_custom_call.1} parent=1 // pred_check
      _
    $region27: #{tpu_custom_call.1} parent=1 // pred_check_branch
      %47 = sbr.rel (0) target = $region29
    $region28: #{tpu_custom_call.1} parent=1 // pred_region
      _
    $region29: #{tpu_custom_call.1} parent=1 // pred_fallthru
      _
    // Predicated region
    $region30: #{tpu_custom_call.1} parent=1 // pred_check
      _
    $region31: #{tpu_custom_call.1} parent=1 // pred_check_branch
      %49 = sbr.rel (0) target = $region33
    $region32: #{tpu_custom_call.1} parent=1 // pred_region
      _
    $region33: #{tpu_custom_call.1} parent=1 // pred_fallthru
      _
    // Predicated region
    $region34: #{tpu_custom_call.1} parent=1 // pred_check
      _
    $region35: #{tpu_custom_call.1} parent=1 // pred_check_branch
      %51 = sbr.rel (0) target = $region37
    $region36: #{tpu_custom_call.1} parent=1 // pred_region
      %52 = dma.done [#allocation3], 128
    $region37: #{tpu_custom_call.1} parent=1 // pred_fallthru
      _
    // Predicated region
    $region38: #{tpu_custom_call.1} parent=1 // pred_check
      _
    $region39: #{tpu_custom_call.1} parent=1 // pred_check_branch
      %54 = sbr.rel (0) target = $region41
    $region40: #{tpu_custom_call.1} parent=1 // pred_region
      %55 = dma.done [#allocation6], 2048
    $region41: #{tpu_custom_call.1} parent=1 // pred_fallthru
      _
    %v56 = vld [vmem:[%s3] sm:$0xff]
    %v57 = vld [vmem:[%s3 + $0x8] sm:$0xff]
    %v58 = vld [vmem:[%s3 + $0x10] sm:$0xff]
    %v59 = vld [vmem:[%s3 + $0x18] sm:$0xff]
    %v60 = vld [vmem:[%s3 + $0x20] sm:$0xff]
    %v61 = vld [vmem:[%s3 + $0x28] sm:$0xff]
    %v62 = vld [vmem:[%s3 + $0x30] sm:$0xff]
    %v63 = vld [vmem:[%s3 + $0x38] sm:$0xff]
    %v64 = vld [vmem:[%s3 + $0x40] sm:$0xff]
    %v65 = vld [vmem:[%s3 + $0x48] sm:$0xff]
    %v66 = vld [vmem:[%s3 + $0x50] sm:$0xff]
    %v67 = vld [vmem:[%s3 + $0x58] sm:$0xff]
    %v68 = vld [vmem:[%s3 + $0x60] sm:$0xff]
    %v69 = vld [vmem:[%s3 + $0x68] sm:$0xff]
    %v70 = vld [vmem:[%s3 + $0x70] sm:$0xff]
    %v71 = vld [vmem:[%s3 + $0x78] sm:$0xff]
    %v72 = vld [vmem:[%s4] sm:$0x1]
    %74 = vset.pattern.permute.xlu0 0
    %75 = vperm.xlu0 %74, %v56
    %v76 = vpop.permute.xlu0 %75
    %79 = vset.pattern.permute.xlu0 0
    %80 = vperm.xlu0 %79, %v57
    %v81 = vpop.permute.xlu0 %80
    %84 = vset.pattern.permute.xlu0 0
    %85 = vperm.xlu0 %84, %v58
    %v86 = vpop.permute.xlu0 %85
    %89 = vset.pattern.permute.xlu0 0
    %90 = vperm.xlu0 %89, %v59
    %v91 = vpop.permute.xlu0 %90
    %94 = vset.pattern.permute.xlu0 0
    %95 = vperm.xlu0 %94, %v60
    %v96 = vpop.permute.xlu0 %95
    %99 = vset.pattern.permute.xlu0 0
    %100 = vperm.xlu0 %99, %v61
    %v101 = vpop.permute.xlu0 %100
    %104 = vset.pattern.permute.xlu0 0
    %105 = vperm.xlu0 %104, %v62
    %v106 = vpop.permute.xlu0 %105
    %109 = vset.pattern.permute.xlu0 0
    %110 = vperm.xlu0 %109, %v63
    %v111 = vpop.permute.xlu0 %110
    %114 = vset.pattern.permute.xlu0 0
    %115 = vperm.xlu0 %114, %v64
    %v116 = vpop.permute.xlu0 %115
    %119 = vset.pattern.permute.xlu0 0
    %120 = vperm.xlu0 %119, %v65
    %v121 = vpop.permute.xlu0 %120
    %124 = vset.pattern.permute.xlu0 0
    %125 = vperm.xlu0 %124, %v66
    %v126 = vpop.permute.xlu0 %125
    %129 = vset.pattern.permute.xlu0 0
    %130 = vperm.xlu0 %129, %v67
    %v131 = vpop.permute.xlu0 %130
    %134 = vset.pattern.permute.xlu0 0
    %135 = vperm.xlu0 %134, %v68
    %v136 = vpop.permute.xlu0 %135
    %139 = vset.pattern.permute.xlu0 0
    %140 = vperm.xlu0 %139, %v69
    %v141 = vpop.permute.xlu0 %140
    %144 = vset.pattern.permute.xlu0 0
    %145 = vperm.xlu0 %144, %v70
    %v146 = vpop.permute.xlu0 %145
    %149 = vset.pattern.permute.xlu0 0
    %150 = vperm.xlu0 %149, %v71
    %v151 = vpop.permute.xlu0 %150
    %v154 = vlaneseq
    %v155 = vshrl.u32 %v154, 7
    %v156 = vsub.s32 0, %v155
    %v157 = vrot.slane %v72, %v156
    %v159 = vmul.f32 %v76, %v157
    %v160 = vmul.f32 %v81, %v157
    %v161 = vmul.f32 %v86, %v157
    %v162 = vmul.f32 %v91, %v157
    %v163 = vmul.f32 %v96, %v157
    %v164 = vmul.f32 %v101, %v157
    %v165 = vmul.f32 %v106, %v157
    %v166 = vmul.f32 %v111, %v157
    %v167 = vmul.f32 %v116, %v157
    %v168 = vmul.f32 %v121, %v157
    %v169 = vmul.f32 %v126, %v157
    %v170 = vmul.f32 %v131, %v157
    %v171 = vmul.f32 %v136, %v157
    %v172 = vmul.f32 %v141, %v157
    %v173 = vmul.f32 %v146, %v157
    %v174 = vmul.f32 %v151, %v157
    %v175 = vld [vmem:[%s1] sm:$0xff]
    %v176 = vld [vmem:[%s1 + $0x8] sm:$0xff]
    %v177 = vld [vmem:[%s1 + $0x10] sm:$0xff]
    %v178 = vld [vmem:[%s1 + $0x18] sm:$0xff]
    %v179 = vld [vmem:[%s1 + $0x20] sm:$0xff]
    %v180 = vld [vmem:[%s1 + $0x28] sm:$0xff]
    %v181 = vld [vmem:[%s1 + $0x30] sm:$0xff]
    %v182 = vld [vmem:[%s1 + $0x38] sm:$0xff]
    %v183 = vld [vmem:[%s1 + $0x40] sm:$0xff]
    %v184 = vld [vmem:[%s1 + $0x48] sm:$0xff]
    %v185 = vld [vmem:[%s1 + $0x50] sm:$0xff]
    %v186 = vld [vmem:[%s1 + $0x58] sm:$0xff]
    %v187 = vld [vmem:[%s1 + $0x60] sm:$0xff]
    %v188 = vld [vmem:[%s1 + $0x68] sm:$0xff]
    %v189 = vld [vmem:[%s1 + $0x70] sm:$0xff]
    %v190 = vld [vmem:[%s1 + $0x78] sm:$0xff]
    %v191 = vld [vmem:[#allocation5] sm:$0xff]
    %v192 = vld [vmem:[#allocation5 + $0x8] sm:$0xff]
    %v193 = vld [vmem:[#allocation5 + $0x10] sm:$0xff]
    %v194 = vld [vmem:[#allocation5 + $0x18] sm:$0xff]
    %v195 = vld [vmem:[#allocation5 + $0x20] sm:$0xff]
    %v196 = vld [vmem:[#allocation5 + $0x28] sm:$0xff]
    %v197 = vld [vmem:[#allocation5 + $0x30] sm:$0xff]
    %v198 = vld [vmem:[#allocation5 + $0x38] sm:$0xff]
    %v199 = vld [vmem:[#allocation5 + $0x40] sm:$0xff]
    %v200 = vld [vmem:[#allocation5 + $0x48] sm:$0xff]
    %v201 = vld [vmem:[#allocation5 + $0x50] sm:$0xff]
    %v202 = vld [vmem:[#allocation5 + $0x58] sm:$0xff]
    %v203 = vld [vmem:[#allocation5 + $0x60] sm:$0xff]
    %v204 = vld [vmem:[#allocation5 + $0x68] sm:$0xff]
    %v205 = vld [vmem:[#allocation5 + $0x70] sm:$0xff]
    %v206 = vld [vmem:[#allocation5 + $0x78] sm:$0xff]
    %v207 = vmul.f32 %v191, %v159
    %v208 = vmul.f32 %v192, %v160
    %v209 = vmul.f32 %v193, %v161
    %v210 = vmul.f32 %v194, %v162
    %v211 = vmul.f32 %v195, %v163
    %v212 = vmul.f32 %v196, %v164
    %v213 = vmul.f32 %v197, %v165
    %v214 = vmul.f32 %v198, %v166
    %v215 = vmul.f32 %v199, %v167
    %v216 = vmul.f32 %v200, %v168
    %v217 = vmul.f32 %v201, %v169
    %v218 = vmul.f32 %v202, %v170
    %v219 = vmul.f32 %v203, %v171
    %v220 = vmul.f32 %v204, %v172
    %v221 = vmul.f32 %v205, %v173
    %v222 = vmul.f32 %v206, %v174
    %v223 = vadd.f32 %v175, %v207
    %v224 = vadd.f32 %v176, %v208
    %v225 = vadd.f32 %v177, %v209
    %v226 = vadd.f32 %v178, %v210
    %v227 = vadd.f32 %v179, %v211
    %v228 = vadd.f32 %v180, %v212
    %v229 = vadd.f32 %v181, %v213
    %v230 = vadd.f32 %v182, %v214
    %v231 = vadd.f32 %v183, %v215
    %v232 = vadd.f32 %v184, %v216
    %v233 = vadd.f32 %v185, %v217
    %v234 = vadd.f32 %v186, %v218
    %v235 = vadd.f32 %v187, %v219
    %v236 = vadd.f32 %v188, %v220
    %v237 = vadd.f32 %v189, %v221
    %v238 = vadd.f32 %v190, %v222
    %v239 = vld [vmem:[#allocation2] sm:$0xff]
    %v240 = vld [vmem:[%s5] sm:$0x1]
    %v241 = vld [vmem:[%s6] sm:$0x1]
    %v242 = vld [vmem:[%s7] sm:$0x1]
    %v243 = vmul.f32 %v241, %v242
    %v244 = vadd.f32 %v240, %v243
    %v246 = vlaneseq
    %v247 = vshrl.u32 %v246, 7
    %v248 = vsub.s32 0, %v247
    %v249 = vrot.slane %v244, %v248
    %251 = vmatprep.subr.mxu0 0.0
    %252 = vmatpush1.xpose.msra.mxu0 %v238
    %253 = vmatprep.subr.mxu0 0.0
    %254 = vmatpush1.xpose.msra.mxu0 %v237
    %255 = vmatprep.subr.mxu0 0.0
    %256 = vmatpush1.xpose.msra.mxu0 %v236
    %257 = vmatprep.subr.mxu0 0.0
    %258 = vmatpush1.xpose.msra.mxu0 %v235
    %259 = vmatprep.subr.mxu0 0.0
    %260 = vmatpush1.xpose.msra.mxu0 %v234
    %261 = vmatprep.subr.mxu0 0.0
    %262 = vmatpush1.xpose.msra.mxu0 %v233
    %263 = vmatprep.subr.mxu0 0.0
    %264 = vmatpush1.xpose.msra.mxu0 %v232
    %265 = vmatprep.subr.mxu0 0.0
    %266 = vmatpush1.xpose.msra.mxu0 %v231
    %267 = vmatprep.subr.mxu0 0.0
    %268 = vmatpush1.xpose.msra.mxu0 %v230
    %269 = vmatprep.subr.mxu0 0.0
    %270 = vmatpush1.xpose.msra.mxu0 %v229
    %271 = vmatprep.subr.mxu0 0.0
    %272 = vmatpush1.xpose.msra.mxu0 %v228
    %273 = vmatprep.subr.mxu0 0.0
    %274 = vmatpush1.xpose.msra.mxu0 %v227
    %275 = vmatprep.subr.mxu0 0.0
    %276 = vmatpush1.xpose.msra.mxu0 %v226
    %277 = vmatprep.subr.mxu0 0.0
    %278 = vmatpush1.xpose.msra.mxu0 %v225
    %279 = vmatprep.subr.mxu0 0.0
    %280 = vmatpush1.xpose.msra.mxu0 %v224
    %281 = vmatprep.subr.mxu0 0.0
    %282 = vmatpush1.xpose.msra.mxu0 %v223
    %283 = vmatprep.subr.mxu0 0.0
    %284 = vmatpush2.xpose.msra.mxu0 0.0
    %285 = vmatprep.subr.mxu0 0.0
    %286 = vmatpush2.xpose.msra.mxu0 0.0
    %287 = vmatprep.subr.mxu0 0.0
    %288 = vmatpush2.xpose.msra.mxu0 0.0
    %289 = vmatprep.subr.mxu0 0.0
    %290 = vmatpush2.xpose.msra.mxu0 0.0
    %291 = vmatprep.subr.mxu0 0.0
    %292 = vmatpush2.xpose.msra.mxu0 0.0
    %293 = vmatprep.subr.mxu0 0.0
    %294 = vmatpush2.xpose.msra.mxu0 0.0
    %295 = vmatprep.subr.mxu0 0.0
    %296 = vmatpush2.xpose.msra.mxu0 0.0
    %297 = vmatprep.subr.mxu0 0.0
    %298 = vmatpush2.xpose.msra.mxu0 0.0
    %299 = vmatprep.subr.mxu0 0.0
    %300 = vmatpush2.xpose.msra.mxu0 0.0
    %301 = vmatprep.subr.mxu0 0.0
    %302 = vmatpush2.xpose.msra.mxu0 0.0
    %303 = vmatprep.subr.mxu0 0.0
    %304 = vmatpush2.xpose.msra.mxu0 0.0
    %305 = vmatprep.subr.mxu0 0.0
    %306 = vmatpush2.xpose.msra.mxu0 0.0
    %307 = vmatprep.subr.mxu0 0.0
    %308 = vmatpush2.xpose.msra.mxu0 0.0
    %309 = vmatprep.subr.mxu0 0.0
    %310 = vmatpush2.xpose.msra.mxu0 0.0
    %311 = vmatprep.subr.mxu0 0.0
    %312 = vmatpush2.xpose.msra.mxu0 0.0
    %313 = vmatprep.subr.mxu0 0.0
    %314 = vmatpush2.xpose.msra.mxu0 0.0
    %315 = vmatprep.mubr.f32.mxu0 0.0
    %316 = vmatmul.mubr.f32.gmra.mxu0 %v239
    %v317 = vpop.f32.mrf.mxu0
    %v318 = vadd.f32 %v249, %v317
    %v319 = vpop.f32.mrf.mxu0
    %320 = vdwg.mxu0
    %321 = vst [vmem:[#allocation7] sm:$0xff] %v318
    // Predicated region
    $region42: #{tpu_custom_call.1} parent=1 // pred_check
      _
    $region43: #{tpu_custom_call.1} parent=1 // pred_check_branch
      %323 = sbr.rel (0) target = $region45
    $region44: #{tpu_custom_call.1} parent=1 // pred_region
      %s325 = ssub.s32 128, 128
      %326 = vsyncadd [#allocation4], %s325
      %s328 = sshll.u32 [#allocation7], 4
      %s329 = int_to_ptr.vmem [resolvable:$true] %s328
      %331 = dma.vmem_to_hbm [thread:$0]  %s329, 128, %s8, [#allocation4]
    $region45: #{tpu_custom_call.1} parent=1 // pred_fallthru
      _
    // Predicated region
    $region46: #{tpu_custom_call.1} parent=1 // pred_check
      _
    $region47: #{tpu_custom_call.1} parent=1 // pred_check_branch
      %333 = sbr.rel (0) target = $region49
    $region48: #{tpu_custom_call.1} parent=1 // pred_region
      %334 = dma.done [#allocation4], 128
    $region49: #{tpu_custom_call.1} parent=1 // pred_fallthru
      _
    %335 = vsyncpa [#allocation3], 1
    %336 = vsyncpa [#allocation6], 1
    %337 = vsyncpa [#allocation4], 1

</llo_original>
